<compile_context>
chip_gen: v7x
topology: tpu7x:2x2x1
jax: 0.10.0
libtpu: 0.0.40
codegen_flags: <defaults>
</compile_context>

<pallas_src>
import jax
import jax.numpy as jnp
from jax.experimental import pallas as pl
from jax.experimental.pallas import tpu as pltpu


def signed_minmax(bit):
    return -(2 ** (bit - 1)), 2 ** (bit - 1) - 1


TO_BIT = 8
BIAS_BIT = 32
QN, QP = signed_minmax(TO_BIT)        # -128, 127
BQN, BQP = signed_minmax(BIAS_BIT)    # -2^31, 2^31 - 1

# Default tile sizes. Double-buffered tiles total ~1.8 MiB here, well under the
# v7x 64 MiB / v5e-v6e 128 MiB VMEM ceilings. Multiples of 128/256 to match the
# MXU and keep lane-dense layouts.
TM, TN, TK = 256, 256, 512


def _round_up(v, m):
    return -(-v // m) * m


def _qlinear_matmul_kernel(x_ref, w_ref, b_ref, ws_ref, out_ref, acc_ref):
    """Grid (M/tm, N/tn, K/tk); K is the (arbitrary) reduction axis.

    x_ref   : VMEM (tm, tk)  activations, bf16 (NOT pre-divided by a_s)
    w_ref   : VMEM (tk, tn)  pre-quantized W_int^T, bf16 (integer values, exact)
    b_ref   : VMEM (1,  tn)  folded bias  b_int * b_s, f32
    ws_ref  : VMEM (1,  1)   weight scale w_s, f32
    out_ref : VMEM (tm, tn)  output tile, f32
    acc_ref : VMEM (tm, tn)  f32 scratch accumulator (resident across K)
    """
    k = pl.program_id(2)

    @pl.when(k == 0)
    def _init():
        acc_ref[...] = jnp.zeros_like(acc_ref)

    acc_ref[...] += jnp.dot(x_ref[...], w_ref[...],
                            preferred_element_type=jnp.float32)

    @pl.when(k == pl.num_programs(2) - 1)
    def _finalize():
        # (x/a_s @ W_int^T + b_int) * b_s == (x @ W_int^T) * w_s + b_int * b_s
        out_ref[...] = (acc_ref[...] * ws_ref[...] + b_ref[...]).astype(out_ref.dtype)


def qlinear_forward(x, a_s, weight, bias):
    """Training-mode QLinear.forward. Returns (out, b_s).

    x      : [..., in_features]
    weight : [out_features, in_features]  (PyTorch layout)
    bias   : [out_features] or None
    a_s    : scalar activation scale
    """
    in_features = x.shape[-1]
    out_features = weight.shape[0]
    a_s = jnp.asarray(a_s, jnp.float32)

    # --- LSQ 'minmax' observer + fake-quant prep (hoisted out of the kernel) ---
    w_s = (jnp.max(jnp.abs(weight)) / QP).astype(jnp.float32)
    b_s = w_s * a_s
    w_int = jnp.round(jnp.clip(weight.astype(jnp.float32) / w_s, QN, QP))  # (N, K)
    wq_t = w_int.T.astype(jnp.bfloat16)                                    # (K, N), exact
    if bias is not None:
        b_int = jnp.round(jnp.clip(bias.astype(jnp.float32) / b_s, BQN, BQP))
        b_fold = (b_int * b_s).astype(jnp.float32)                         # (N,)
    else:
        b_fold = jnp.zeros((out_features,), jnp.float32)

    # --- flatten batch dims; bf16 activations feed the MXU natively ---
    x2 = x.reshape(-1, in_features).astype(jnp.bfloat16)
    m = x2.shape[0]

    # --- tile sizes: sublane dims multiples of 16 (bf16), lane dims of 128 ---
    tm = min(TM, _round_up(m, 16))
    tn = min(TN, _round_up(out_features, 128))
    tk = min(TK, _round_up(in_features, 128))
    mp = _round_up(m, tm)
    np_ = _round_up(out_features, tn)
    kp = _round_up(in_features, tk)

    x_p = jnp.pad(x2, ((0, mp - m), (0, kp - in_features)))
    w_p = jnp.pad(wq_t, ((0, kp - in_features), (0, np_ - out_features)))
    b_p = jnp.pad(b_fold, (0, np_ - out_features)).reshape(1, np_)
    ws_arr = w_s.reshape(1, 1)

    grid = (mp // tm, np_ // tn, kp // tk)

    out_p = pl.pallas_call(
        _qlinear_matmul_kernel,
        out_shape=jax.ShapeDtypeStruct((mp, np_), jnp.float32),
        grid=grid,
        in_specs=[
            pl.BlockSpec((tm, tk), lambda i, j, k: (i, k)),   # x tile
            pl.BlockSpec((tk, tn), lambda i, j, k: (k, j)),   # W_int^T tile
            pl.BlockSpec((1, tn), lambda i, j, k: (0, j)),    # folded bias
            pl.BlockSpec((1, 1), lambda i, j, k: (0, 0)),     # w_s scalar
        ],
        out_specs=pl.BlockSpec((tm, tn), lambda i, j, k: (i, j)),
        scratch_shapes=[pltpu.VMEM((tm, tn), jnp.float32)],
        compiler_params=pltpu.CompilerParams(
            dimension_semantics=("parallel", "parallel", "arbitrary")),
    )(x_p, w_p, b_p, ws_arr)

    out = out_p[:m, :out_features].reshape(*x.shape[:-1], out_features)
    return out, b_s


def qlinear_reference(x, a_s, weight, bias):
    """Pure-JAX (f32) reference of the same forward semantics."""
    w_s = jnp.max(jnp.abs(weight)) / QP
    b_s = w_s * a_s
    w_int = jnp.round(jnp.clip(weight / w_s, QN, QP))
    b_int = jnp.round(jnp.clip(bias / b_s, BQN, BQP))
    x_q = x / a_s
    out = (jnp.einsum('...k,nk->...n', x_q, w_int) + b_int) * b_s
    return out, b_s


if __name__ == "__main__":
    key = jax.random.PRNGKey(0)
    k_x, k_w, k_b = jax.random.split(key, 3)

    batch, seq, in_features, out_features = 2, 8, 32, 64
    x = jax.random.normal(k_x, (batch, seq, in_features), jnp.float32)
    weight = 0.02 * jax.random.normal(k_w, (out_features, in_features), jnp.float32)
    bias = 0.01 * jax.random.normal(k_b, (out_features,), jnp.float32)
    a_s = jnp.float32(0.05)   # activation scale fed to QLinear.forward

    out, b_s = qlinear_forward(x, a_s, weight, bias)
    out = jax.block_until_ready(out)
    b_s = jax.block_until_ready(b_s)

    ref_out, ref_bs = qlinear_reference(x, a_s, weight, bias)
    assert out.shape == (batch, seq, out_features)
    # bf16 activations on the MXU -> relaxed tolerance vs the f32 reference.
    assert jnp.allclose(out, ref_out, rtol=2e-2, atol=2e-2), "output mismatch"
    assert jnp.allclose(b_s, ref_bs, rtol=1e-6, atol=1e-7), "b_s mismatch"

    print("KERNEL_OK")
</pallas_src>

<mosaic_0001>
module attributes {stable_mosaic.version = 11 : i64} {
  func.func @_qlinear_matmul_kernel(%arg0: i32, %arg1: i32, %arg2: i32, %arg3: memref<16x128xbf16, #tpu.memory_space<vmem>>, %arg4: memref<128x128xbf16, #tpu.memory_space<vmem>>, %arg5: memref<1x128xf32, #tpu.memory_space<vmem>>, %arg6: memref<1x1xf32, #tpu.memory_space<vmem>>, %arg7: memref<16x128xf32, #tpu.memory_space<vmem>>, %arg8: memref<16x128xf32, #tpu.memory_space<vmem>>) attributes {dimension_semantics = [#tpu.dimension_semantics<parallel>, #tpu.dimension_semantics<parallel>, #tpu.dimension_semantics<arbitrary>], iteration_bounds = array<i64: 1, 1, 1>, scalar_prefetch = 0 : i64, scratch_operands = 1 : i64, tpu.core_type = #tpu.core_type<tc>, window_params = [{transform_indices = @transform_0, window_bounds = array<i64: 16, 128>}, {transform_indices = @transform_1, window_bounds = array<i64: 128, 128>}, {transform_indices = @transform_2, window_bounds = array<i64: 1, 128>}, {pipeline_mode = #tpu.pipeline_mode<synchronous>, transform_indices = @transform_3, window_bounds = array<i64: 1, 1>}, {transform_indices = @transform_4, window_bounds = array<i64: 16, 128>}]} {
    %c0_i32 = arith.constant 0 : i32
    %0 = arith.cmpi eq, %arg2, %c0_i32 : i32
    %1 = arith.extui %0 : i1 to i32
    %c0_i32_0 = arith.constant 0 : i32
    %2 = arith.cmpi ne, %1, %c0_i32_0 : i32
    scf.if %2 {
      %cst_10 = arith.constant 0.000000e+00 : f32
      %12 = vector.broadcast %cst_10 : f32 to vector<16x128xf32>
      %c0_11 = arith.constant 0 : index
      %c0_12 = arith.constant 0 : index
      %13 = vector.load %arg8[%c0_11, %c0_12] : memref<16x128xf32, #tpu.memory_space<vmem>>, vector<16x128xf32>
      tpu.vector_store %arg8[%c0_11, %c0_12], %12 {strides = array<i32>} : memref<16x128xf32, #tpu.memory_space<vmem>>, vector<16x128xf32>,
    } else {
    }
    %c0 = arith.constant 0 : index
    %c0_1 = arith.constant 0 : index
    %3 = vector.load %arg8[%c0, %c0_1] : memref<16x128xf32, #tpu.memory_space<vmem>>, vector<16x128xf32>
    %c0_2 = arith.constant 0 : index
    %c0_3 = arith.constant 0 : index
    %4 = vector.load %arg3[%c0_2, %c0_3] : memref<16x128xbf16, #tpu.memory_space<vmem>>, vector<16x128xbf16>
    %c0_4 = arith.constant 0 : index
    %c0_5 = arith.constant 0 : index
    %5 = vector.load %arg4[%c0_4, %c0_5] : memref<128x128xbf16, #tpu.memory_space<vmem>>, vector<128x128xbf16>
    %cst = arith.constant dense<0.000000e+00> : vector<16x128xf32>
    %6 = tpu.matmul %4, %5, %cst {dimension_numbers = #tpu.dot_dimension_numbers<[1], [0], [0], [1], [0, 0, 1, 1], [], []>} : vector<16x128xbf16>, vector<128x128xbf16>, vector<16x128xf32> -> vector<16x128xf32>
    %7 = arith.addf %3, %6 : vector<16x128xf32>
    %c0_6 = arith.constant 0 : index
    %c0_7 = arith.constant 0 : index
    %8 = vector.load %arg8[%c0_6, %c0_7] : memref<16x128xf32, #tpu.memory_space<vmem>>, vector<16x128xf32>
    tpu.vector_store %arg8[%c0_6, %c0_7], %7 {strides = array<i32>} : memref<16x128xf32, #tpu.memory_space<vmem>>, vector<16x128xf32>,
    %c0_i32_8 = arith.constant 0 : i32
    %9 = arith.cmpi eq, %arg2, %c0_i32_8 : i32
    %10 = arith.extui %9 : i1 to i32
    %c0_i32_9 = arith.constant 0 : i32
    %11 = arith.cmpi ne, %10, %c0_i32_9 : i32
    scf.if %11 {
      %c0_10 = arith.constant 0 : index
      %c0_11 = arith.constant 0 : index
      %12 = vector.load %arg8[%c0_10, %c0_11] : memref<16x128xf32, #tpu.memory_space<vmem>>, vector<16x128xf32>
      %c0_12 = arith.constant 0 : index
      %c0_13 = arith.constant 0 : index
      %13 = vector.load %arg6[%c0_12, %c0_13] : memref<1x1xf32, #tpu.memory_space<vmem>>, vector<1x1xf32>
      %14 = vector.broadcast %13 : vector<1x1xf32> to vector<16x128xf32>
      %15 = arith.mulf %12, %14 : vector<16x128xf32>
      %c0_14 = arith.constant 0 : index
      %c0_15 = arith.constant 0 : index
      %16 = vector.load %arg5[%c0_14, %c0_15] : memref<1x128xf32, #tpu.memory_space<vmem>>, vector<1x128xf32>
      %17 = vector.broadcast %16 : vector<1x128xf32> to vector<16x128xf32>
      %18 = arith.addf %15, %17 : vector<16x128xf32>
      %c0_16 = arith.constant 0 : index
      %c0_17 = arith.constant 0 : index
      %19 = vector.load %arg7[%c0_16, %c0_17] : memref<16x128xf32, #tpu.memory_space<vmem>>, vector<16x128xf32>
      tpu.vector_store %arg7[%c0_16, %c0_17], %18 {strides = array<i32>} : memref<16x128xf32, #tpu.memory_space<vmem>>, vector<16x128xf32>,
    } else {
    }
    return
  }
  func.func @transform_0(%arg0: i32, %arg1: i32, %arg2: i32) -> (i32, i32) {
    %c0_i32 = arith.constant 0 : i32
    return %arg0, %arg2 : i32, i32
  }
  func.func @transform_1(%arg0: i32, %arg1: i32, %arg2: i32) -> (i32, i32) {
    %c0_i32 = arith.constant 0 : i32
    return %arg2, %arg1 : i32, i32
  }
  func.func @transform_2(%arg0: i32, %arg1: i32, %arg2: i32) -> (i32, i32) {
    %c0_i32 = arith.constant 0 : i32
    %c0_i32_0 = arith.constant 0 : i32
    return %c0_i32, %arg1 : i32, i32
  }
  func.func @transform_3(%arg0: i32, %arg1: i32, %arg2: i32) -> (i32, i32) {
    %c0_i32 = arith.constant 0 : i32
    %c0_i32_0 = arith.constant 0 : i32
    %c0_i32_1 = arith.constant 0 : i32
    return %c0_i32, %c0_i32_0 : i32, i32
  }
  func.func @transform_4(%arg0: i32, %arg1: i32, %arg2: i32) -> (i32, i32) {
    %c0_i32 = arith.constant 0 : i32
    return %arg0, %arg1 : i32, i32
  }
}

</mosaic_0001>

<llo_original>
// kernel: tpu_custom_call.1
$region0: #{tpu_custom_call.1}
  #allocation0 [shape = 'u32[]', space=smem, size = 0x4, offset = 0x4, fixed_abs, tag = 'smem constant byte address 0x4 - core index']
  #allocation1 [shape = 'u32[144,128]{1,0:T(1,128)}', space=vmem, size = 0x12000, scoped, tag = 'internal scratch']
  #allocation2 [shape = 'f32[16,128]{1,0:T(8,128)}', space=vmem, size = 0x2000, scoped, tag = 'scratch operand']
  #allocation3 [shape = 'f32[1,1]{1,0:T(1,128)S(1)}', space=vmem, size = 0x200, scoped, tag = 'scoped memory for tpu_custom_call.1']
  %s0 = inlined_call_operand.hbm [shape: bf16[16,128], index: 0, kind: input, shape index: {}]
  %s1 = inlined_call_operand.hbm [shape: bf16[128,128], index: 1, kind: input, shape index: {}]
  %s2 = inlined_call_operand.vmem [shape: f32[1,128], index: 2, kind: input, shape index: {}]
  %s3 = inlined_call_operand.<no memory space> [shape: f32[1,1], index: 3, kind: input, shape index: {}]
  %s4 = inlined_call_operand.hbm [shape: f32[16,128], index: 4, kind: output, shape index: {}]
  %s5 = sld [smem:[#allocation0]]
  $region42: #{tpu_custom_call.1} parent=0
    _
  %s7 = ssub.s32 1, %s5
  %s8 = scalar_select 0, %s7, %s5
  %v9 = vstv %s3
  %10 = vst [vmem:[#allocation3] sm:$0x1] %v9
  $region1: #{tpu_custom_call.1} parent=0
    #allocation4 [shape = 'u8[4096]{0}', space=vmem, size = 0x1000, scoped, tag = 'input window, operand 0, single buffered']
    #allocation5 [shape = 's32[1]{0}', space=sflag, size = 0x4, scoped, tag = 'scoped memory for tpu_custom_call.1']
    #allocation6 [shape = 's32[1]{0}', space=sflag, size = 0x4, scoped, tag = 'scoped memory for tpu_custom_call.1']
    #allocation7 [shape = 'u8[32768]{0}', space=vmem, size = 0x8000, scoped, tag = 'input window, operand 1, single buffered']
    #allocation8 [shape = 's32[1]{0}', space=sflag, size = 0x4, scoped, tag = 'scoped memory for tpu_custom_call.1']
    #allocation9 [shape = 'u8[8192]{0}', space=vmem, size = 0x2000, scoped, tag = 'output window, operand 0, single buffered']
    %11 = vsyncpa [#allocation5], 0
    %12 = vsyncpa [#allocation8], 0
    %13 = vsyncpa [#allocation6], 0
    // Predicated region
    $region2: #{tpu_custom_call.1} parent=1 // pred_check
      _
    $region3: #{tpu_custom_call.1} parent=1 // pred_check_branch
      %15 = sbr.rel (0) target = $region5
    $region4: #{tpu_custom_call.1} parent=1 // pred_region
      %s17 = ssub.s32 128, 128
      %18 = vsyncadd [#allocation5], %s17
      %s19 = sshll.u32 [#allocation4], 4
      %s20 = int_to_ptr.vmem [resolvable:$true] %s19
      %25 = dma.hbm_to_vmem [thread:$0]  %s0, 128, %s20, [#allocation5], 64, 64, 4
    $region5: #{tpu_custom_call.1} parent=1 // pred_fallthru
      _
    // Predicated region
    $region6: #{tpu_custom_call.1} parent=1 // pred_check
      _
    $region7: #{tpu_custom_call.1} parent=1 // pred_check_branch
      %27 = sbr.rel (0) target = $region9
    $region8: #{tpu_custom_call.1} parent=1 // pred_region
      %s29 = ssub.s32 1024, 1024
      %30 = vsyncadd [#allocation8], %s29
      %s31 = sshll.u32 [#allocation7], 4
      %s32 = int_to_ptr.vmem [resolvable:$true] %s31
      %37 = dma.hbm_to_vmem [thread:$0]  %s1, 1024, %s32, [#allocation8], 64, 64, 4
    $region9: #{tpu_custom_call.1} parent=1 // pred_fallthru
      _
    // Predicated region
    $region10: #{tpu_custom_call.1} parent=1 // pred_check
      _
    $region11: #{tpu_custom_call.1} parent=1 // pred_check_branch
      %39 = sbr.rel (0) target = $region13
    $region12: #{tpu_custom_call.1} parent=1 // pred_region
      _
    $region13: #{tpu_custom_call.1} parent=1 // pred_fallthru
      _
    // Predicated region
    $region14: #{tpu_custom_call.1} parent=1 // pred_check
      _
    $region15: #{tpu_custom_call.1} parent=1 // pred_check_branch
      %41 = sbr.rel (0) target = $region17
    $region16: #{tpu_custom_call.1} parent=1 // pred_region
      _
    $region17: #{tpu_custom_call.1} parent=1 // pred_fallthru
      _
    // Predicated region
    $region18: #{tpu_custom_call.1} parent=1 // pred_check
      _
    $region19: #{tpu_custom_call.1} parent=1 // pred_check_branch
      %43 = sbr.rel (0) target = $region21
    $region20: #{tpu_custom_call.1} parent=1 // pred_region
      %44 = dma.done [#allocation5], 128
    $region21: #{tpu_custom_call.1} parent=1 // pred_fallthru
      _
    // Predicated region
    $region22: #{tpu_custom_call.1} parent=1 // pred_check
      _
    $region23: #{tpu_custom_call.1} parent=1 // pred_check_branch
      %46 = sbr.rel (0) target = $region25
    $region24: #{tpu_custom_call.1} parent=1 // pred_region
      %47 = dma.done [#allocation8], 1024
    $region25: #{tpu_custom_call.1} parent=1 // pred_fallthru
      _
    %p49 = scmp.eq.s32.totalorder 0, 0
    // Predicated region
    $region26: #{tpu_custom_call.1} parent=1 // pred_check
      %p50 = pneg %p49
    $region27: #{tpu_custom_call.1} parent=1 // pred_check_branch
      %52 = sbr.rel (%p50) target = $region29
    $region28: #{tpu_custom_call.1} parent=1 // pred_region
      %53 = vst [vmem:[#allocation2] sm:$0xff] 0.0
      %54 = vst [vmem:[#allocation2 + $0x8] sm:$0xff] 0.0
    $region29: #{tpu_custom_call.1} parent=1 // pred_fallthru
      _
    %v55 = vld [vmem:[#allocation2] sm:$0xff]
    %v56 = vld [vmem:[#allocation2 + $0x8] sm:$0xff]
    %v57 = vld [vmem:[#allocation4] sm:$0xf]
    %v58 = vld [vmem:[#allocation4 + $0x4] sm:$0xf]
    %v59 = vld [vmem:[#allocation7] sm:$0xf]
    %v60 = vld [vmem:[#allocation7 + $0x4] sm:$0xf]
    %v61 = vld [vmem:[#allocation7 + $0x8] sm:$0xf]
    %v62 = vld [vmem:[#allocation7 + $0xc] sm:$0xf]
    %v63 = vld [vmem:[#allocation7 + $0x10] sm:$0xf]
    %v64 = vld [vmem:[#allocation7 + $0x14] sm:$0xf]
    %v65 = vld [vmem:[#allocation7 + $0x18] sm:$0xf]
    %v66 = vld [vmem:[#allocation7 + $0x1c] sm:$0xf]
    %v67 = vld [vmem:[#allocation7 + $0x20] sm:$0xf]
    %v68 = vld [vmem:[#allocation7 + $0x24] sm:$0xf]
    %v69 = vld [vmem:[#allocation7 + $0x28] sm:$0xf]
    %v70 = vld [vmem:[#allocation7 + $0x2c] sm:$0xf]
    %v71 = vld [vmem:[#allocation7 + $0x30] sm:$0xf]
    %v72 = vld [vmem:[#allocation7 + $0x34] sm:$0xf]
    %v73 = vld [vmem:[#allocation7 + $0x38] sm:$0xf]
    %v74 = vld [vmem:[#allocation7 + $0x3c] sm:$0xf]
    %v77 = vunpack.c.l.b16 %v57
    %v78 = vunpack.c.l.b16 %v58
    %v79 = vpack.c.b16 %v78, %v77
    %v97 = vunpack.c.l.b16 %v59
    %v98 = vunpack.c.l.b16 %v60
    %v99 = vunpack.c.l.b16 %v61
    %v100 = vunpack.c.l.b16 %v62
    %v101 = vunpack.c.l.b16 %v63
    %v102 = vunpack.c.l.b16 %v64
    %v103 = vunpack.c.l.b16 %v65
    %v104 = vunpack.c.l.b16 %v66
    %v105 = vunpack.c.l.b16 %v67
    %v106 = vunpack.c.l.b16 %v68
    %v107 = vunpack.c.l.b16 %v69
    %v108 = vunpack.c.l.b16 %v70
    %v109 = vunpack.c.l.b16 %v71
    %v110 = vunpack.c.l.b16 %v72
    %v111 = vunpack.c.l.b16 %v73
    %v112 = vunpack.c.l.b16 %v74
    %v113 = vpack.c.b16 %v98, %v97
    %v114 = vpack.c.b16 %v100, %v99
    %v115 = vpack.c.b16 %v102, %v101
    %v116 = vpack.c.b16 %v104, %v103
    %v117 = vpack.c.b16 %v106, %v105
    %v118 = vpack.c.b16 %v108, %v107
    %v119 = vpack.c.b16 %v110, %v109
    %v120 = vpack.c.b16 %v112, %v111
    %129 = vmatprep.subr.bf16.mxu0 0
    %130 = vmatpush1.bf16.msra.mxu0 %v113
    %131 = vmatprep.subr.bf16.mxu0 0
    %132 = vmatpush1.bf16.msra.mxu0 %v114
    %133 = vmatprep.subr.bf16.mxu0 0
    %134 = vmatpush1.bf16.msra.mxu0 %v115
    %135 = vmatprep.subr.bf16.mxu0 0
    %136 = vmatpush1.bf16.msra.mxu0 %v116
    %137 = vmatprep.subr.bf16.mxu0 0
    %138 = vmatpush1.bf16.msra.mxu0 %v117
    %139 = vmatprep.subr.bf16.mxu0 0
    %140 = vmatpush1.bf16.msra.mxu0 %v118
    %141 = vmatprep.subr.bf16.mxu0 0
    %142 = vmatpush1.bf16.msra.mxu0 %v119
    %143 = vmatprep.subr.bf16.mxu0 0
    %144 = vmatpush1.bf16.msra.mxu0 %v120
    %145 = vmatprep.subr.bf16.mxu0 0
    %146 = vmatpush1.bf16.msra.mxu0 0
    %147 = vmatprep.subr.bf16.mxu0 0
    %148 = vmatpush1.bf16.msra.mxu0 0
    %149 = vmatprep.subr.bf16.mxu0 0
    %150 = vmatpush1.bf16.msra.mxu0 0
    %151 = vmatprep.subr.bf16.mxu0 0
    %152 = vmatpush1.bf16.msra.mxu0 0
    %153 = vmatprep.subr.bf16.mxu0 0
    %154 = vmatpush1.bf16.msra.mxu0 0
    %155 = vmatprep.subr.bf16.mxu0 0
    %156 = vmatpush1.bf16.msra.mxu0 0
    %157 = vmatprep.subr.bf16.mxu0 0
    %158 = vmatpush1.bf16.msra.mxu0 0
    %159 = vmatprep.subr.bf16.mxu0 0
    %160 = vmatpush1.bf16.msra.mxu0 0
    %161 = vmatprep.mubr.bf16.mxu0 0
    %162 = vmatmul.mubr.bf16.gmra.mrb[0].mxu0 %v79
    %v163 = vpop.f32.mrb[0].mxu0
    %v164 = vadd.f32 0.0, %v163
    %v165 = vpop.f32.mrb[0].mxu0
    %v166 = vpop.f32.mrb[0].mxu0
    %v167 = vadd.f32 0.0, %v166
    %v168 = vpop.f32.mrb[0].mxu0
    %169 = vdwg.mxu0
    %v170 = vadd.f32 %v55, %v164
    %v171 = vadd.f32 %v56, %v167
    %172 = vst [vmem:[#allocation2] sm:$0xff] %v170
    %173 = vst [vmem:[#allocation2 + $0x8] sm:$0xff] %v171
    // Predicated region
    $region30: #{tpu_custom_call.1} parent=1 // pred_check
      %p174 = pneg %p49
    $region31: #{tpu_custom_call.1} parent=1 // pred_check_branch
      %176 = sbr.rel (%p174) target = $region33
    $region32: #{tpu_custom_call.1} parent=1 // pred_region
      %v177 = vld [vmem:[#allocation2] sm:$0xff]
      %v178 = vld [vmem:[#allocation2 + $0x8] sm:$0xff]
      %v179 = vld [vmem:[#allocation3] sm:$0x1]
      %v181 = vlaneseq
      %v182 = vshrl.u32 %v181, 7
      %v183 = vsub.s32 0, %v182
      %v184 = vrot.slane %v179, %v183
      %185 = vset.pattern.permute.xlu0 0
      %186 = vperm.xlu0 %185, %v184
      %v187 = vpop.permute.xlu0 %186
      %v189 = vmul.f32 %v177, %v187
      %v190 = vmul.f32 %v178, %v187
      %v191 = vld [vmem:[%s2] sm:$0x1]
      %v193 = vlaneseq
      %v194 = vshrl.u32 %v193, 7
      %v195 = vsub.s32 0, %v194
      %v196 = vrot.slane %v191, %v195
      %v198 = vadd.f32 %v189, %v196
      %v199 = vadd.f32 %v190, %v196
      %200 = vst [vmem:[#allocation9] sm:$0xff] %v198
      %201 = vst [vmem:[#allocation9 + $0x8] sm:$0xff] %v199
    $region33: #{tpu_custom_call.1} parent=1 // pred_fallthru
      _
    // Predicated region
    $region34: #{tpu_custom_call.1} parent=1 // pred_check
      _
    $region35: #{tpu_custom_call.1} parent=1 // pred_check_branch
      %203 = sbr.rel (0) target = $region37
    $region36: #{tpu_custom_call.1} parent=1 // pred_region
      %s205 = ssub.s32 256, 256
      %206 = vsyncadd [#allocation6], %s205
      %s207 = sshll.u32 [#allocation9], 4
      %s208 = int_to_ptr.vmem [resolvable:$true] %s207
      %213 = dma.vmem_to_hbm [thread:$0]  %s208, 256, %s4, [#allocation6], 128, 128, 8
    $region37: #{tpu_custom_call.1} parent=1 // pred_fallthru
      _
    // Predicated region
    $region38: #{tpu_custom_call.1} parent=1 // pred_check
      _
    $region39: #{tpu_custom_call.1} parent=1 // pred_check_branch
      %215 = sbr.rel (0) target = $region41
    $region40: #{tpu_custom_call.1} parent=1 // pred_region
      %216 = dma.done [#allocation6], 256
    $region41: #{tpu_custom_call.1} parent=1 // pred_fallthru
      _
    %217 = vsyncpa [#allocation5], 1
    %218 = vsyncpa [#allocation8], 1
    %219 = vsyncpa [#allocation6], 1

</llo_original>
